<compile_context>
chip_gen: v5e
topology: v5e:2x2
jax: 0.10.0
libtpu: 0.0.40
codegen_flags: <defaults>
</compile_context>

<pallas_src>
import functools

import jax
import jax.numpy as jnp
from jax.experimental import pallas as pl
from jax.experimental.pallas import tpu as pltpu


def _bn2d_train_kernel(x_ref, params_ref, y_ref, stats_ref,
                       *, eps, momentum, num_samples):
    # x_ref:      (N, TC, HW)   one channel block, full batch & spatial extent
    # params_ref: (TC, 4)       columns = [gamma, beta, running_mean, running_var]
    # y_ref:      (N, TC, HW)
    # stats_ref:  (TC, 2)       columns = [new_running_mean, new_running_var]
    x = x_ref[...].astype(jnp.float32)
    p = params_ref[...].astype(jnp.float32)
    gamma, beta = p[:, 0:1], p[:, 1:2]          # (TC, 1)
    rmean, rvar = p[:, 2:3], p[:, 3:4]          # (TC, 1)

    inv_m = 1.0 / num_samples

    # Per-channel mean over (N, HW): reduce N by vreg adds, HW by lane reduce.
    col_sum = jnp.sum(x, axis=0)                                  # (TC, HW)
    mean = jnp.sum(col_sum, axis=1, keepdims=True) * inv_m        # (TC, 1)

    # Two-pass (centered) biased variance — avoids E[x^2]-E[x]^2 cancellation.
    centered = x - mean[None]                                     # (N, TC, HW)
    csq_sum = jnp.sum(centered * centered, axis=0)                # (TC, HW)
    var = jnp.sum(csq_sum, axis=1, keepdims=True) * inv_m         # (TC, 1)

    # Fold normalize + affine into a single per-channel scale/shift.
    inv_std = jax.lax.rsqrt(var + eps)                            # (TC, 1)
    scale = gamma * inv_std                                       # (TC, 1)
    shift = beta - mean * scale                                   # (TC, 1)
    y_ref[...] = (x * scale[None] + shift[None]).astype(y_ref.dtype)

    # Running-stats update (matches update_running_mean_and_var).
    if num_samples != 1:
        corr = num_samples / (num_samples - 1)
    else:
        corr = 1.0
    new_rm = (1.0 - momentum) * rmean + momentum * mean           # (TC, 1)
    new_rv = (1.0 - momentum) * rvar + momentum * (var * corr)    # (TC, 1)
    stats_ref[...] = jnp.concatenate([new_rm, new_rv], axis=1).astype(stats_ref.dtype)


def _choose_channel_block(C, N, HW, itemsize, budget_bytes=4 * 1024 * 1024):
    """Pick a channel-block size TC that (a) divides C, (b) is a multiple of 8
    or equals C (Mosaic sublane constraint on the second-to-last block dim),
    and (c) keeps one (N, TC, HW) f32 buffer under ~budget_bytes so double
    buffering of input+output plus in-kernel temporaries fits scoped VMEM."""
    per_channel = N * HW * max(int(itemsize), 4)   # f32 compute temporaries
    max_tc = max(1, budget_bytes // per_channel)
    if C <= max_tc:
        return C                                   # single block over channels
    tc = (max_tc // 8) * 8
    while tc >= 8:
        if C % tc == 0:
            return tc
        tc -= 8
    # TODO(synk): C has no multiple-of-8 divisor that fits the VMEM budget;
    # fall back to one monolithic channel block (correct, may need more VMEM).
    return C


def batchnorm2d_train(x, gamma, beta, running_mean, running_var,
                      *, eps=1e-9, momentum=0.1):
    """Forward pass of MyBatchNorm2d in training mode (affine=True,
    track_running_stats=True).

    x: (N, C, H, W)
    gamma, beta, running_mean, running_var: (C,)
    Returns: (y (N,C,H,W), new_running_mean (C,), new_running_var (C,))
    """
    N, C, H, W = x.shape
    HW = H * W
    M = N * HW

    # Free layout changes (no data movement): NCHW -> (N, C, H*W).
    x3d = x.reshape(N, C, HW)
    params = jnp.stack(
        [gamma, beta, running_mean, running_var], axis=1
    ).astype(jnp.float32)                                          # (C, 4)

    TC = _choose_channel_block(C, N, HW, jnp.dtype(x.dtype).itemsize)
    grid = (C // TC,)

    kernel = functools.partial(
        _bn2d_train_kernel, eps=float(eps), momentum=float(momentum),
        num_samples=int(M))

    itemsize = jnp.dtype(x.dtype).itemsize
    cost = pl.CostEstimate(
        flops=6 * N * C * HW,
        transcendentals=C,
        bytes_accessed=2 * N * C * HW * itemsize + 6 * C * 4,
    )

    y3d, stats = pl.pallas_call(
        kernel,
        out_shape=(
            jax.ShapeDtypeStruct((N, C, HW), x.dtype),
            jax.ShapeDtypeStruct((C, 2), jnp.float32),
        ),
        grid=grid,
        in_specs=[
            pl.BlockSpec((N, TC, HW), lambda c: (0, c, 0)),
            pl.BlockSpec((TC, 4), lambda c: (c, 0)),
        ],
        out_specs=(
            pl.BlockSpec((N, TC, HW), lambda c: (0, c, 0)),
            pl.BlockSpec((TC, 2), lambda c: (c, 0)),
        ),
        compiler_params=pltpu.CompilerParams(
            dimension_semantics=("parallel",),
            vmem_limit_bytes=32 * 1024 * 1024,
        ),
        cost_estimate=cost,
    )(x3d, params)

    y = y3d.reshape(N, C, H, W)
    return y, stats[:, 0], stats[:, 1]


def _reference(x, gamma, beta, running_mean, running_var, eps=1e-9, momentum=0.1):
    # Pure-JAX reference mirroring the PyTorch module (training path).
    N, C, H, W = x.shape
    m = N * H * W
    mean = jnp.mean(x, axis=(0, 2, 3))
    var = jnp.var(x, axis=(0, 2, 3))  # biased (unbiased=False)
    corr = m / (m - 1) if m != 1 else 1.0
    new_rm = (1 - momentum) * running_mean + momentum * mean
    new_rv = (1 - momentum) * running_var + momentum * var * corr
    y = ((x - mean[None, :, None, None]) /
         jnp.sqrt(var[None, :, None, None] + eps) *
         gamma[None, :, None, None] + beta[None, :, None, None])
    return y, new_rm, new_rv


if __name__ == "__main__":
    key = jax.random.PRNGKey(0)
    N, C, H, W = 2, 4, 16, 16

    x = jax.random.normal(key, (N, C, H, W), dtype=jnp.float32)
    # Deterministic parameter init matching MyBatchNorm2d.__init__:
    gamma = jnp.ones((C,), jnp.float32)
    beta = jnp.zeros((C,), jnp.float32)
    running_mean = jnp.zeros((C,), jnp.float32)
    running_var = jnp.ones((C,), jnp.float32)

    y, new_rm, new_rv = batchnorm2d_train(
        x, gamma, beta, running_mean, running_var, eps=1e-9, momentum=0.1)
    jax.block_until_ready((y, new_rm, new_rv))

    y_ref, rm_ref, rv_ref = _reference(x, gamma, beta, running_mean, running_var)
    assert jnp.allclose(y, y_ref, atol=1e-5, rtol=1e-5)
    assert jnp.allclose(new_rm, rm_ref, atol=1e-6, rtol=1e-6)
    assert jnp.allclose(new_rv, rv_ref, atol=1e-6, rtol=1e-6)

    print("KERNEL_OK")
</pallas_src>

<mosaic_0001>
module attributes {stable_mosaic.version = 11 : i64} {
  func.func @_bn2d_train_kernel(%arg0: i32, %arg1: memref<2x4x256xf32, #tpu.memory_space<vmem>>, %arg2: memref<4x4xf32, #tpu.memory_space<vmem>>, %arg3: memref<2x4x256xf32, #tpu.memory_space<vmem>>, %arg4: memref<4x2xf32, #tpu.memory_space<vmem>>) attributes {dimension_semantics = [#tpu.dimension_semantics<parallel>], iteration_bounds = array<i64: 1>, scalar_prefetch = 0 : i64, scratch_operands = 0 : i64, tpu.core_type = #tpu.core_type<tc>, window_params = [{transform_indices = @transform_0, window_bounds = array<i64: 2, 4, 256>}, {transform_indices = @transform_1, window_bounds = array<i64: 4, 4>}, {transform_indices = @transform_2, window_bounds = array<i64: 2, 4, 256>}, {transform_indices = @transform_3, window_bounds = array<i64: 4, 2>}]} {
    %c0 = arith.constant 0 : index
    %c0_0 = arith.constant 0 : index
    %c0_1 = arith.constant 0 : index
    %0 = vector.load %arg1[%c0, %c0_0, %c0_1] : memref<2x4x256xf32, #tpu.memory_space<vmem>>, vector<2x4x256xf32>
    %c0_2 = arith.constant 0 : index
    %c0_3 = arith.constant 0 : index
    %1 = vector.load %arg2[%c0_2, %c0_3] : memref<4x4xf32, #tpu.memory_space<vmem>>, vector<4x4xf32>
    %2 = vector.extract_strided_slice %1 {offsets = [0, 0], sizes = [4, 1], strides = [1, 1]} : vector<4x4xf32> to vector<4x1xf32>
    %3 = vector.extract_strided_slice %1 {offsets = [0, 1], sizes = [4, 1], strides = [1, 1]} : vector<4x4xf32> to vector<4x1xf32>
    %4 = vector.extract_strided_slice %1 {offsets = [0, 2], sizes = [4, 1], strides = [1, 1]} : vector<4x4xf32> to vector<4x1xf32>
    %5 = vector.extract_strided_slice %1 {offsets = [0, 3], sizes = [4, 1], strides = [1, 1]} : vector<4x4xf32> to vector<4x1xf32>
    %cst = arith.constant dense<0.000000e+00> : vector<4x256xf32>
    %6 = vector.multi_reduction <add>, %0, %cst [0] : vector<2x4x256xf32> to vector<4x256xf32>
    %cst_4 = arith.constant dense<0.000000e+00> : vector<4xf32>
    %7 = vector.multi_reduction <add>, %6, %cst_4 [1] : vector<4x256xf32> to vector<4xf32>
    %8 = vector.shape_cast %7 : vector<4xf32> to vector<4x1xf32>
    %cst_5 = arith.constant 0.001953125 : f32
    %9 = vector.broadcast %cst_5 : f32 to vector<4x1xf32>
    %10 = arith.mulf %8, %9 : vector<4x1xf32>
    %11 = vector.shape_cast %10 : vector<4x1xf32> to vector<1x4x1xf32>
    %12 = vector.broadcast %11 : vector<1x4x1xf32> to vector<2x4x256xf32>
    %13 = arith.subf %0, %12 : vector<2x4x256xf32>
    %14 = arith.mulf %13, %13 : vector<2x4x256xf32>
    %cst_6 = arith.constant dense<0.000000e+00> : vector<4x256xf32>
    %15 = vector.multi_reduction <add>, %14, %cst_6 [0] : vector<2x4x256xf32> to vector<4x256xf32>
    %cst_7 = arith.constant dense<0.000000e+00> : vector<4xf32>
    %16 = vector.multi_reduction <add>, %15, %cst_7 [1] : vector<4x256xf32> to vector<4xf32>
    %17 = vector.shape_cast %16 : vector<4xf32> to vector<4x1xf32>
    %cst_8 = arith.constant 0.001953125 : f32
    %18 = vector.broadcast %cst_8 : f32 to vector<4x1xf32>
    %19 = arith.mulf %17, %18 : vector<4x1xf32>
    %cst_9 = arith.constant 9.99999971E-10 : f32
    %20 = vector.broadcast %cst_9 : f32 to vector<4x1xf32>
    %21 = arith.addf %19, %20 : vector<4x1xf32>
    %22 = math.rsqrt %21 : vector<4x1xf32>
    %23 = arith.mulf %2, %22 : vector<4x1xf32>
    %24 = arith.mulf %10, %23 : vector<4x1xf32>
    %25 = arith.subf %3, %24 : vector<4x1xf32>
    %26 = vector.shape_cast %23 : vector<4x1xf32> to vector<1x4x1xf32>
    %27 = vector.broadcast %26 : vector<1x4x1xf32> to vector<2x4x256xf32>
    %28 = arith.mulf %0, %27 : vector<2x4x256xf32>
    %29 = vector.shape_cast %25 : vector<4x1xf32> to vector<1x4x1xf32>
    %30 = vector.broadcast %29 : vector<1x4x1xf32> to vector<2x4x256xf32>
    %31 = arith.addf %28, %30 : vector<2x4x256xf32>
    %c0_10 = arith.constant 0 : index
    %c0_11 = arith.constant 0 : index
    %c0_12 = arith.constant 0 : index
    %32 = vector.load %arg3[%c0_10, %c0_11, %c0_12] : memref<2x4x256xf32, #tpu.memory_space<vmem>>, vector<2x4x256xf32>
    tpu.vector_store %arg3[%c0_10, %c0_11, %c0_12], %31 {strides = array<i32>} : memref<2x4x256xf32, #tpu.memory_space<vmem>>, vector<2x4x256xf32>,
    %cst_13 = arith.constant 0.899999976 : f32
    %33 = vector.broadcast %cst_13 : f32 to vector<4x1xf32>
    %34 = arith.mulf %33, %4 : vector<4x1xf32>
    %cst_14 = arith.constant 1.000000e-01 : f32
    %35 = vector.broadcast %cst_14 : f32 to vector<4x1xf32>
    %36 = arith.mulf %35, %10 : vector<4x1xf32>
    %37 = arith.addf %34, %36 : vector<4x1xf32>
    %cst_15 = arith.constant 0.899999976 : f32
    %38 = vector.broadcast %cst_15 : f32 to vector<4x1xf32>
    %39 = arith.mulf %38, %5 : vector<4x1xf32>
    %cst_16 = arith.constant 1.00195694 : f32
    %40 = vector.broadcast %cst_16 : f32 to vector<4x1xf32>
    %41 = arith.mulf %19, %40 : vector<4x1xf32>
    %cst_17 = arith.constant 1.000000e-01 : f32
    %42 = vector.broadcast %cst_17 : f32 to vector<4x1xf32>
    %43 = arith.mulf %42, %41 : vector<4x1xf32>
    %44 = arith.addf %39, %43 : vector<4x1xf32>
    %45 = tpu.concatenate %37, %44 in 1 : vector<4x1xf32>, vector<4x1xf32> -> vector<4x2xf32>
    %c0_18 = arith.constant 0 : index
    %c0_19 = arith.constant 0 : index
    %46 = vector.load %arg4[%c0_18, %c0_19] : memref<4x2xf32, #tpu.memory_space<vmem>>, vector<4x2xf32>
    tpu.vector_store %arg4[%c0_18, %c0_19], %45 {strides = array<i32>} : memref<4x2xf32, #tpu.memory_space<vmem>>, vector<4x2xf32>,
    return
  }
  func.func @transform_0(%arg0: i32) -> (i32, i32, i32) {
    %c0_i32 = arith.constant 0 : i32
    %c0_i32_0 = arith.constant 0 : i32
    %c0_i32_1 = arith.constant 0 : i32
    return %c0_i32, %arg0, %c0_i32_0 : i32, i32, i32
  }
  func.func @transform_1(%arg0: i32) -> (i32, i32) {
    %c0_i32 = arith.constant 0 : i32
    %c0_i32_0 = arith.constant 0 : i32
    return %arg0, %c0_i32 : i32, i32
  }
  func.func @transform_2(%arg0: i32) -> (i32, i32, i32) {
    %c0_i32 = arith.constant 0 : i32
    %c0_i32_0 = arith.constant 0 : i32
    %c0_i32_1 = arith.constant 0 : i32
    return %c0_i32, %arg0, %c0_i32_0 : i32, i32, i32
  }
  func.func @transform_3(%arg0: i32) -> (i32, i32) {
    %c0_i32 = arith.constant 0 : i32
    %c0_i32_0 = arith.constant 0 : i32
    return %arg0, %c0_i32 : i32, i32
  }
}

</mosaic_0001>

<llo_original>
// kernel: tpu_custom_call.1
$region0: #{tpu_custom_call.1}
  #allocation0 [shape = 'u32[]', space=smem, size = 0x4, offset = 0x4, fixed_abs, tag = 'smem constant byte address 0x4 - core index']
  #allocation1 [shape = 'u32[72,128]{1,0:T(1,128)}', space=vmem, size = 0x9000, scoped, tag = 'internal scratch']
  %s0 = inlined_call_operand.hbm [shape: f32[2,4,256], index: 0, kind: input, shape index: {}]
  %s1 = inlined_call_operand.hbm [shape: f32[4,4], index: 1, kind: input, shape index: {}]
  %s2 = inlined_call_operand.hbm [shape: f32[2,4,256], index: 2, kind: output, shape index: {0}]
  %s3 = inlined_call_operand.vmem [shape: f32[4,2], index: 3, kind: output, shape index: {1}]
  %4 = xla_tuple %s2, %s3
  %s5 = sld [smem:[#allocation0]]
  $region34: #{tpu_custom_call.1} parent=0
    _
  %s7 = ssub.s32 1, %s5
  %s8 = scalar_select 0, %s7, %s5
  $region1: #{tpu_custom_call.1} parent=0
    #allocation2 [shape = 'u8[8192]{0}', space=vmem, size = 0x2000, scoped, tag = 'input window, operand 0, single buffered']
    #allocation3 [shape = 's32[1]{0}', space=sflag, size = 0x4, scoped, tag = 'scoped memory for tpu_custom_call.1']
    #allocation4 [shape = 's32[1]{0}', space=sflag, size = 0x4, scoped, tag = 'scoped memory for tpu_custom_call.1']
    #allocation5 [shape = 'u8[2048]{0}', space=vmem, size = 0x800, scoped, tag = 'input window, operand 1, single buffered']
    #allocation6 [shape = 's32[1]{0}', space=sflag, size = 0x4, scoped, tag = 'scoped memory for tpu_custom_call.1']
    #allocation7 [shape = 'u8[8192]{0}', space=vmem, size = 0x2000, scoped, tag = 'output window, operand 0, single buffered']
    %9 = vsyncpa [#allocation3], 0
    %10 = vsyncpa [#allocation6], 0
    %11 = vsyncpa [#allocation4], 0
    // Predicated region
    $region2: #{tpu_custom_call.1} parent=1 // pred_check
      _
    $region3: #{tpu_custom_call.1} parent=1 // pred_check_branch
      %13 = sbr.rel (0) target = $region5
    $region4: #{tpu_custom_call.1} parent=1 // pred_region
      %15 = vsyncadd [#allocation3], 0
      %s16 = sshll.u32 %s0, 4
      %s17 = int_to_ptr.hbm [resolvable:$true] %s16
      %s18 = sshll.u32 [#allocation2], 4
      %s19 = int_to_ptr.vmem [resolvable:$true] %s18
      %24 = dma.hbm_to_vmem [thread:$0]  %s17, 256, %s19, [#allocation3], 128, 128, 8
    $region5: #{tpu_custom_call.1} parent=1 // pred_fallthru
      _
    // Predicated region
    $region6: #{tpu_custom_call.1} parent=1 // pred_check
      _
    $region7: #{tpu_custom_call.1} parent=1 // pred_check_branch
      %26 = sbr.rel (0) target = $region9
    $region8: #{tpu_custom_call.1} parent=1 // pred_region
      %28 = vsyncadd [#allocation6], 0
      %s30 = sshll.u32 %s1, 4
      %s31 = int_to_ptr.hbm [resolvable:$true] %s30
      %s32 = sshll.u32 [#allocation5], 4
      %s33 = int_to_ptr.vmem [resolvable:$true] %s32
      %35 = dma.hbm_to_vmem [thread:$0]  %s31, 64, %s33, [#allocation6]
    $region9: #{tpu_custom_call.1} parent=1 // pred_fallthru
      _
    // Predicated region
    $region10: #{tpu_custom_call.1} parent=1 // pred_check
      _
    $region11: #{tpu_custom_call.1} parent=1 // pred_check_branch
      %37 = sbr.rel (0) target = $region13
    $region12: #{tpu_custom_call.1} parent=1 // pred_region
      %39 = dma.done [#allocation3], 256
    $region13: #{tpu_custom_call.1} parent=1 // pred_fallthru
      _
    // Predicated region
    $region14: #{tpu_custom_call.1} parent=1 // pred_check
      _
    $region15: #{tpu_custom_call.1} parent=1 // pred_check_branch
      %41 = sbr.rel (0) target = $region17
    $region16: #{tpu_custom_call.1} parent=1 // pred_region
      %43 = dma.done [#allocation6], 64
    $region17: #{tpu_custom_call.1} parent=1 // pred_fallthru
      _
    %v44 = vld [vmem:[#allocation2] sm:$0xff]
    %v45 = vld [vmem:[#allocation2 + $0x8] sm:$0xff]
    %v46 = vld [vmem:[#allocation5] sm:$0xf]
    %49 = vst [vmem:[#allocation1] ss:$2 sm:$0xff] %v44
    %v50 = vld.sshfl [vmem:[#allocation1] sm:$0xff pattern:$0x75316420]
    %v51 = vld.sshfl [vmem:[#allocation1 + $0x8] sm:$0xff pattern:$0x75316420]
    %s52 = scalar_lea.vmem [#allocation1], 16
    %53 = vst [vmem:[%s52] ss:$2 sm:$0xff] %v45
    %v54 = vld.sshfl [vmem:[#allocation1 + $0x10] sm:$0xff pattern:$0x75316420]
    %v55 = vld.sshfl [vmem:[#allocation1 + $0x18] sm:$0xff pattern:$0x75316420]
    %vm60 = vcmask 1043456
    %v61 = vsel %vm60, %v50, 0.0
    %v62 = vsel %vm60, %v54, 0.0
    %v63 = vadd.f32 %v61, %v62
    %v64 = vsel %vm60, %v51, 0.0
    %v65 = vsel %vm60, %v55, 0.0
    %v66 = vadd.f32 %v64, %v65
    %v67 = vsel %vm60, %v63, 0.0
    %v68 = vsel %vm60, %v66, 0.0
    %v69 = vadd.f32 %v67, %v68
    %70 = vadd.xlane.f32.xlu0 %v69
    %v71 = vpop.xlane.xlu0 %70
    %v72 = vmul.f32 %v71, 0.001953125
    %v75 = vunpack.c.l.s4 839922192
    %v76 = vunpack.c.0.s8 %v75
    %v77 = vperm.slane %v72, %v76
    %v79 = vsub.f32 %v44, %v77
    %v80 = vsub.f32 %v45, %v77
    %v81 = vmul.f32 %v79, %v79
    %v82 = vmul.f32 %v80, %v80
    %85 = vst [vmem:[#allocation1] ss:$2 sm:$0xff] %v81
    %v86 = vld.sshfl [vmem:[#allocation1] sm:$0xff pattern:$0x75316420]
    %v87 = vld.sshfl [vmem:[#allocation1 + $0x8] sm:$0xff pattern:$0x75316420]
    %s88 = scalar_lea.vmem [#allocation1], 16
    %89 = vst [vmem:[%s88] ss:$2 sm:$0xff] %v82
    %v90 = vld.sshfl [vmem:[#allocation1 + $0x10] sm:$0xff pattern:$0x75316420]
    %v91 = vld.sshfl [vmem:[#allocation1 + $0x18] sm:$0xff pattern:$0x75316420]
    %v96 = vsel %vm60, %v86, 0.0
    %v97 = vsel %vm60, %v90, 0.0
    %v98 = vadd.f32 %v96, %v97
    %v99 = vsel %vm60, %v87, 0.0
    %v100 = vsel %vm60, %v91, 0.0
    %v101 = vadd.f32 %v99, %v100
    %v102 = vsel %vm60, %v98, 0.0
    %v103 = vsel %vm60, %v101, 0.0
    %v104 = vadd.f32 %v102, %v103
    %105 = vadd.xlane.f32.xlu0 %v104
    %v106 = vpop.xlane.xlu0 %105
    %v107 = vmul.f32 %v106, 0.001953125
    %v108 = vadd.f32 %v107, 1e-09
    %v109 = vrsqrt.pop %v108
    %v110 = vmul.f32 %v109, %v108
    %v111 = vmul.f32 %v110, %v109
    %v112 = vmul.f32 0.5, %v111
    %v113 = vsub.f32 1.5, %v112
    %v114 = vmul.f32 %v109, %v113
    %vm115 = vweird.f32 %v108
    %vm116 = vweird.f32 %v109
    %vm117 = vmor %vm115, %vm116
    %v118 = vsel %vm117, %v109, %v114
    %v119 = vmul.f32 %v46, %v118
    %v120 = vmul.f32 %v72, %v119
    %122 = vrot.lane.b32.xlu0 %v120, 1
    %v123 = vpop.permute.xlu0 %122
    %v125 = vsub.f32 %v46, %v123
    %127 = vset.pattern.permute.xlu0 0
    %128 = vperm.xlu0 %127, %v119
    %v129 = vpop.permute.xlu0 %128
    %v131 = vunpack.c.l.s4 839922192
    %v132 = vunpack.c.0.s8 %v131
    %v133 = vperm.slane %v129, %v132
    %v135 = vmul.f32 %v44, %v133
    %v136 = vmul.f32 %v45, %v133
    %138 = vset.pattern.permute.xlu0 1
    %139 = vperm.xlu0 %138, %v125
    %v140 = vpop.permute.xlu0 %139
    %v142 = vunpack.c.l.s4 839922192
    %v143 = vunpack.c.0.s8 %v142
    %v144 = vperm.slane %v140, %v143
    %v146 = vadd.f32 %v135, %v144
    %v147 = vadd.f32 %v136, %v144
    %148 = vst [vmem:[#allocation7] sm:$0xff] %v146
    %149 = vst [vmem:[#allocation7 + $0x8] sm:$0xff] %v147
    %v150 = vmul.f32 %v46, 0.9
    %v151 = vmul.f32 %v72, 0.1
    %v152 = vadd.f32 %v150, %v151
    %v153 = vmul.f32 %v107, 1.0019569
    %v154 = vmul.f32 %v153, 0.1
    %v155 = vadd.f32 %v150, %v154
    %157 = vrot.lane.b32.xlu0 %v152, 126
    %v158 = vpop.permute.xlu0 %157
    %161 = vrot.lane.b32.xlu0 %v155, 126
    %v162 = vpop.permute.xlu0 %161
    %vm164 = vcmask 7168
    %v165 = vsel %vm164, %v158, %v162
    %vm166 = vcmask 11264
    %167 = vst.msk [vmem:[%s3] sm:$0xf] %vm166, %v165
    // Predicated region
    $region18: #{tpu_custom_call.1} parent=1 // pred_check
      _
    $region19: #{tpu_custom_call.1} parent=1 // pred_check_branch
      %169 = sbr.rel (0) target = $region21
    $region20: #{tpu_custom_call.1} parent=1 // pred_region
      %171 = vsyncadd [#allocation4], 0
      %s172 = sshll.u32 [#allocation7], 4
      %s173 = int_to_ptr.vmem [resolvable:$true] %s172
      %s174 = sshll.u32 %s2, 4
      %s175 = int_to_ptr.hbm [resolvable:$true] %s174
      %180 = dma.vmem_to_hbm [thread:$0]  %s173, 256, %s175, [#allocation4], 128, 128, 8
    $region21: #{tpu_custom_call.1} parent=1 // pred_fallthru
      _
    // Predicated region
    $region22: #{tpu_custom_call.1} parent=1 // pred_check
      _
    $region23: #{tpu_custom_call.1} parent=1 // pred_check_branch
      %182 = sbr.rel (0) target = $region25
    $region24: #{tpu_custom_call.1} parent=1 // pred_region
      _
    $region25: #{tpu_custom_call.1} parent=1 // pred_fallthru
      _
    // Predicated region
    $region26: #{tpu_custom_call.1} parent=1 // pred_check
      _
    $region27: #{tpu_custom_call.1} parent=1 // pred_check_branch
      %184 = sbr.rel (0) target = $region29
    $region28: #{tpu_custom_call.1} parent=1 // pred_region
      %186 = dma.done [#allocation4], 256
    $region29: #{tpu_custom_call.1} parent=1 // pred_fallthru
      _
    // Predicated region
    $region30: #{tpu_custom_call.1} parent=1 // pred_check
      _
    $region31: #{tpu_custom_call.1} parent=1 // pred_check_branch
      %188 = sbr.rel (0) target = $region33
    $region32: #{tpu_custom_call.1} parent=1 // pred_region
      _
    $region33: #{tpu_custom_call.1} parent=1 // pred_fallthru
      _
    %189 = vsyncpa [#allocation3], 1
    %190 = vsyncpa [#allocation6], 1
    %191 = vsyncpa [#allocation4], 1

</llo_original>
